<compile_context>
chip_gen: v7x
topology: tpu7x:2x2x1
jax: 0.10.0
libtpu: 0.0.40
codegen_flags: <defaults>
</compile_context>

<pallas_src>
import functools

import jax
import jax.numpy as jnp
from jax.experimental import pallas as pl
from jax.experimental.pallas import tpu as pltpu

_SELU_ALPHA = 1.6732632423543772848170429916717
_SELU_SCALE = 1.0507009873554804934193349852946

_LANE = 128
# ~2 MiB (f32) per input block -> <=12 MiB total double-buffered footprint with
# concat=True; safe under the 32 MiB scoped-VMEM limit on v5e/v6e/v7x.
_TARGET_BLOCK_ELEMS = 512 * 1024
_VMEM_LIMIT_BYTES = 32 * 1024 * 1024


# ---------------------------------------------------------------------------
# Activation closures (eval-mode semantics of the PyTorch module).
# ---------------------------------------------------------------------------
def _make_elementwise_activation(act_fun: str, **kwargs):
    """Elementwise activation closure.

    NOTE: the `kwargs.get(k) if kwargs.get(k) else default` pattern deliberately
    mirrors the original PyTorch module (including its falsy-value quirk, e.g.
    negative_slope=0.0 silently becomes 0.01) so forward semantics match the spec.
    """
    act = act_fun.lower()

    if act == "relu":
        return lambda x: jnp.maximum(x, 0.0)
    if act == "leakyrelu":
        slope = kwargs.get("negative_slope") if kwargs.get("negative_slope") else 0.01
        return lambda x: jnp.where(x >= 0.0, x, slope * x)
    if act == "relu6":
        return lambda x: jnp.clip(x, 0.0, 6.0)
    if act == "rrelu":
        # TODO(synk): RReLU samples a random slope per element in training mode;
        # this implements eval-mode semantics (fixed slope = mean of bounds).
        lower = kwargs.get("lower") if kwargs.get("lower") else 0.125
        upper = kwargs.get("upper") if kwargs.get("upper") else (1.0 / 3.0)
        slope = 0.5 * (lower + upper)
        return lambda x: jnp.where(x >= 0.0, x, slope * x)
    if act == "elu":
        alpha = kwargs.get("alpha") if kwargs.get("alpha") else 1.0
        return lambda x: jnp.where(x > 0.0, x, alpha * (jnp.exp(x) - 1.0))
    if act == "selu":
        return lambda x: _SELU_SCALE * jnp.where(
            x > 0.0, x, _SELU_ALPHA * (jnp.exp(x) - 1.0)
        )
    if act == "celu":
        alpha = kwargs.get("alpha") if kwargs.get("alpha") else 1.0
        return lambda x: jnp.where(x > 0.0, x, alpha * (jnp.exp(x / alpha) - 1.0))
    if act == "sigmoid":
        return lambda x: 1.0 / (1.0 + jnp.exp(-x))
    if act == "softplus":
        beta = kwargs.get("beta") if kwargs.get("beta") else 1.0
        threshold = kwargs.get("threshold") if kwargs.get("threshold") else 20.0
        return lambda x: jnp.where(
            beta * x > threshold, x, jnp.log1p(jnp.exp(beta * x)) / beta
        )
    if act == "none":
        return lambda x: x
    raise ValueError(f"unknown act_fun: {act_fun}")


def _resolve_softmax_dim(kwargs):
    # Mirror the module: dim=0/None (falsy) -> None -> PyTorch _get_softmax_dim
    # picks dim=1 for a 4-D input.  Negative dims are normalized against the
    # 4-D (concatenated) tensor.
    dim = kwargs.get("dim") if kwargs.get("dim") else None
    if dim is None:
        return 1
    return dim % 4


# ---------------------------------------------------------------------------
# Kernels
# ---------------------------------------------------------------------------
def _elementwise_kernel(x_ref, o_ref, *, act, concat):
    x = x_ref[0, :, :].astype(jnp.float32)          # (TS, 128) or (C, HW)
    if concat:
        # o_ref block: (1, 2, TS, 128) / (1, 2, C, HW) -- no concatenate.
        o_ref[0, 0, :, :] = act(x).astype(o_ref.dtype)
        o_ref[0, 1, :, :] = act(-x).astype(o_ref.dtype)
    else:
        o_ref[0, :, :] = act(x).astype(o_ref.dtype)


def _softmax_channel_kernel(x_ref, o_ref, *, concat):
    # Softmax over channels (dim=1).  x block: (1, C, TL).
    x = x_ref[0, :, :].astype(jnp.float32)           # (C, TL)
    if concat:
        # Denominator of softmax over cat([x, -x], channel) computed algebraically.
        m = jnp.max(jnp.abs(x), axis=0, keepdims=True)
        ep = jnp.exp(x - m)
        en = jnp.exp(-x - m)
        denom = jnp.sum(ep, axis=0, keepdims=True) + jnp.sum(en, axis=0, keepdims=True)
        o_ref[0, 0, :, :] = (ep / denom).astype(o_ref.dtype)
        o_ref[0, 1, :, :] = (en / denom).astype(o_ref.dtype)
    else:
        m = jnp.max(x, axis=0, keepdims=True)
        e = jnp.exp(x - m)
        o_ref[0, :, :] = (e / jnp.sum(e, axis=0, keepdims=True)).astype(o_ref.dtype)


def _softmax_spatial_kernel(x_ref, o_ref, *, concat, axis):
    # Softmax over H (axis=1) or W (axis=2) of the per-batch (C, H, W) block.
    x = x_ref[0, :, :, :].astype(jnp.float32)        # (C, H, W)

    def sm(v):
        m = jnp.max(v, axis=axis, keepdims=True)
        e = jnp.exp(v - m)
        return e / jnp.sum(e, axis=axis, keepdims=True)

    if concat:
        # Spatial softmax does not mix channels: the two concat halves are independent.
        o_ref[0, 0, :, :, :] = sm(x).astype(o_ref.dtype)
        o_ref[0, 1, :, :, :] = sm(-x).astype(o_ref.dtype)
    else:
        o_ref[0, :, :, :] = sm(x).astype(o_ref.dtype)


# ---------------------------------------------------------------------------
# pallas_call wrappers
# ---------------------------------------------------------------------------
def _elementwise_call(x, act, concat, donate_input):
    B, C, H, W = x.shape
    HW = H * W
    CHW = C * HW
    C_out = 2 * C if concat else C
    params = lambda dims: pltpu.CompilerParams(
        dimension_semantics=dims, vmem_limit_bytes=_VMEM_LIMIT_BYTES
    )
    io_alias = {0: 0} if (donate_input and not concat) else {}

    if CHW % _LANE == 0:
        # Lane/sublane-dense layout: (B, S, 128), tiled along S.
        S = CHW // _LANE
        max_ts = max(8, (_TARGET_BLOCK_ELEMS // _LANE) // 8 * 8)
        TS = S if S <= max_ts else max_ts
        grid = (B, pl.cdiv(S, TS))
        xr = x.reshape(B, S, _LANE)
        in_specs = [pl.BlockSpec((1, TS, _LANE), lambda b, t: (b, t, 0))]
        if concat:
            out_shape = jax.ShapeDtypeStruct((B, 2, S, _LANE), x.dtype)
            out_specs = pl.BlockSpec((1, 2, TS, _LANE), lambda b, t: (b, 0, t, 0))
        else:
            out_shape = jax.ShapeDtypeStruct((B, S, _LANE), x.dtype)
            out_specs = pl.BlockSpec((1, TS, _LANE), lambda b, t: (b, t, 0))
        dims = ("parallel", "parallel")
    else:
        # Fallback for C*H*W not divisible by 128: full-extent per-batch block.
        grid = (B,)
        xr = x.reshape(B, C, HW)
        in_specs = [pl.BlockSpec((1, C, HW), lambda b: (b, 0, 0))]
        if concat:
            out_shape = jax.ShapeDtypeStruct((B, 2, C, HW), x.dtype)
            out_specs = pl.BlockSpec((1, 2, C, HW), lambda b: (b, 0, 0, 0))
        else:
            out_shape = jax.ShapeDtypeStruct((B, C, HW), x.dtype)
            out_specs = pl.BlockSpec((1, C, HW), lambda b: (b, 0, 0))
        dims = ("parallel",)

    kernel = functools.partial(_elementwise_kernel, act=act, concat=concat)
    out = pl.pallas_call(
        kernel,
        out_shape=out_shape,
        grid=grid,
        in_specs=in_specs,
        out_specs=out_specs,
        input_output_aliases=io_alias,
        compiler_params=params(dims),
    )(xr)
    return out.reshape(B, C_out, H, W)


def _softmax_call(x, concat, dim):
    B, C, H, W = x.shape
    HW = H * W
    C_out = 2 * C if concat else C
    params = lambda dims: pltpu.CompilerParams(
        dimension_semantics=dims, vmem_limit_bytes=_VMEM_LIMIT_BYTES
    )

    if dim == 0:
        # TODO(synk): softmax over the batch axis (only reachable via dim=-4) not implemented.
        raise NotImplementedError("softmax over the batch axis is not supported")

    if dim == 1:
        # Channel softmax: keep C on sublanes, tile the (lane) HW axis.
        xr = x.reshape(B, C, HW)
        max_tl = max(_LANE, (_TARGET_BLOCK_ELEMS // max(C, 1)) // _LANE * _LANE)
        TL = HW if HW <= max_tl else max_tl
        grid = (B, pl.cdiv(HW, TL))
        in_specs = [pl.BlockSpec((1, C, TL), lambda b, t: (b, 0, t))]
        if concat:
            out_shape = jax.ShapeDtypeStruct((B, 2, C, HW), x.dtype)
            out_specs = pl.BlockSpec((1, 2, C, TL), lambda b, t: (b, 0, 0, t))
        else:
            out_shape = jax.ShapeDtypeStruct((B, C, HW), x.dtype)
            out_specs = pl.BlockSpec((1, C, TL), lambda b, t: (b, 0, t))
        kernel = functools.partial(_softmax_channel_kernel, concat=concat)
        out = pl.pallas_call(
            kernel,
            out_shape=out_shape,
            grid=grid,
            in_specs=in_specs,
            out_specs=out_specs,
            compiler_params=params(("parallel", "parallel")),
        )(xr)
        return out.reshape(B, C_out, H, W)

    # dim in (2, 3): softmax over a spatial axis; per-batch full block.
    axis = dim - 1  # axis inside the (C, H, W) block
    grid = (B,)
    in_specs = [pl.BlockSpec((1, C, H, W), lambda b: (b, 0, 0, 0))]
    if concat:
        out_shape = jax.ShapeDtypeStruct((B, 2, C, H, W), x.dtype)
        out_specs = pl.BlockSpec((1, 2, C, H, W), lambda b: (b, 0, 0, 0, 0))
    else:
        out_shape = jax.ShapeDtypeStruct((B, C, H, W), x.dtype)
        out_specs = pl.BlockSpec((1, C, H, W), lambda b: (b, 0, 0, 0))
    kernel = functools.partial(_softmax_spatial_kernel, concat=concat, axis=axis)
    out = pl.pallas_call(
        kernel,
        out_shape=out_shape,
        grid=grid,
        in_specs=in_specs,
        out_specs=out_specs,
        compiler_params=params(("parallel",)),
    )(x)
    return out.reshape(B, C_out, H, W)


def active_fun(x, act_fun: str, concat: bool = False, *, donate_input: bool = False, **kwargs):
    """Pallas implementation of ActiveFun.forward.  x: (B, C, H, W) NCHW."""
    if x.ndim != 4:
        raise ValueError("expected NCHW input")
    if act_fun.lower() == "softmax":
        return _softmax_call(x, concat, _resolve_softmax_dim(kwargs))
    act = _make_elementwise_activation(act_fun, **kwargs)
    return _elementwise_call(x, act, concat, donate_input)


# ---------------------------------------------------------------------------
# Pure-JAX reference for correctness checking.
# ---------------------------------------------------------------------------
def _ref_active_fun(x, act_fun, concat=False, **kwargs):
    xc = jnp.concatenate([x, -x], axis=1) if concat else x
    if act_fun.lower() == "softmax":
        dim = _resolve_softmax_dim(kwargs)
        return jax.nn.softmax(xc.astype(jnp.float32), axis=dim).astype(x.dtype)
    fn = _make_elementwise_activation(act_fun, **kwargs)
    return fn(xc.astype(jnp.float32)).astype(x.dtype)


if __name__ == "__main__":
    key = jax.random.PRNGKey(0)
    x = jax.random.normal(key, (2, 4, 16, 16), dtype=jnp.float32)

    cases = [
        ("leakyrelu", True, {}),
        ("relu", False, {}),
        ("elu", True, {"alpha": 1.0}),
        ("selu", False, {}),
        ("celu", True, {"alpha": 0.8}),
        ("rrelu", False, {}),
        ("sigmoid", False, {}),
        ("softplus", False, {"beta": 2.0, "threshold": 10.0}),
        ("softmax", True, {}),           # default dim -> channels
        ("softmax", False, {"dim": 1}),
        ("softmax", True, {"dim": 3}),   # spatial softmax path
        ("none", True, {}),
    ]
    for act_name, concat, kw in cases:
        out = jax.block_until_ready(active_fun(x, act_name, concat=concat, **kw))
        ref = _ref_active_fun(x, act_name, concat=concat, **kw)
        assert out.shape == ref.shape, (act_name, concat, out.shape, ref.shape)
        assert jnp.allclose(out, ref, atol=1e-5, rtol=1e-5), (act_name, concat)

    # C*H*W not divisible by 128 exercises the full-block fallback layout.
    x_odd = jax.random.normal(jax.random.PRNGKey(1), (2, 3, 5, 7), dtype=jnp.float32)
    for act_name, concat, kw in [("relu", True, {}), ("sigmoid", False, {})]:
        out = jax.block_until_ready(active_fun(x_odd, act_name, concat=concat, **kw))
        ref = _ref_active_fun(x_odd, act_name, concat=concat, **kw)
        assert out.shape == ref.shape
        assert jnp.allclose(out, ref, atol=1e-5, rtol=1e-5), (act_name, concat, "odd")

    # Larger activation map exercises the lane-tiled multi-block-per-batch path.
    x_big = jax.random.normal(jax.random.PRNGKey(2), (1, 16, 256, 256), dtype=jnp.float32)
    out = jax.block_until_ready(active_fun(x_big, "leakyrelu", concat=True))
    ref = _ref_active_fun(x_big, "leakyrelu", concat=True)
    assert out.shape == ref.shape
    assert jnp.allclose(out, ref, atol=1e-5, rtol=1e-5), "big"

    print("KERNEL_OK")
</pallas_src>

<mosaic_0001>
module attributes {stable_mosaic.version = 11 : i64} {
  func.func @_elementwise_kernel(%arg0: i32, %arg1: i32, %arg2: memref<1x8x128xf32, #tpu.memory_space<vmem>>, %arg3: memref<1x2x8x128xf32, #tpu.memory_space<vmem>>) attributes {dimension_semantics = [#tpu.dimension_semantics<parallel>, #tpu.dimension_semantics<parallel>], iteration_bounds = array<i64: 2, 1>, scalar_prefetch = 0 : i64, scratch_operands = 0 : i64, tpu.core_type = #tpu.core_type<tc>, window_params = [{transform_indices = @transform_0, window_bounds = array<i64: 1, 8, 128>}, {transform_indices = @transform_1, window_bounds = array<i64: 1, 2, 8, 128>}]} {
    %c0 = arith.constant 0 : index
    %c0_0 = arith.constant 0 : index
    %c0_1 = arith.constant 0 : index
    %0 = vector.load %arg2[%c0, %c0_0, %c0_1] : memref<1x8x128xf32, #tpu.memory_space<vmem>>, vector<1x8x128xf32>
    %1 = vector.shape_cast %0 : vector<1x8x128xf32> to vector<8x128xf32>
    %cst = arith.constant 0.000000e+00 : f32
    %2 = vector.broadcast %cst : f32 to vector<8x128xf32>
    %3 = arith.cmpf oge, %1, %2 : vector<8x128xf32>
    %cst_2 = arith.constant 0.00999999977 : f32
    %4 = vector.broadcast %cst_2 : f32 to vector<8x128xf32>
    %5 = arith.mulf %4, %1 : vector<8x128xf32>
    %6 = arith.select %3, %1, %5 : vector<8x128xi1>, vector<8x128xf32>
    %c0_3 = arith.constant 0 : index
    %c0_4 = arith.constant 0 : index
    %c0_5 = arith.constant 0 : index
    %c0_6 = arith.constant 0 : index
    %7 = vector.load %arg3[%c0_3, %c0_4, %c0_5, %c0_6] : memref<1x2x8x128xf32, #tpu.memory_space<vmem>>, vector<1x1x8x128xf32>
    %8 = vector.shape_cast %7 : vector<1x1x8x128xf32> to vector<8x128xf32>
    %9 = vector.shape_cast %6 : vector<8x128xf32> to vector<1x1x8x128xf32>
    tpu.vector_store %arg3[%c0_3, %c0_4, %c0_5, %c0_6], %9 {strides = array<i32>} : memref<1x2x8x128xf32, #tpu.memory_space<vmem>>, vector<1x1x8x128xf32>,
    %cst_7 = arith.constant 0.000000e+00 : f32
    %10 = vector.broadcast %cst_7 : f32 to vector<8x128xf32>
    %11 = arith.subf %10, %1 : vector<8x128xf32>
    %cst_8 = arith.constant 0.000000e+00 : f32
    %12 = vector.broadcast %cst_8 : f32 to vector<8x128xf32>
    %13 = arith.cmpf oge, %11, %12 : vector<8x128xf32>
    %cst_9 = arith.constant 0.00999999977 : f32
    %14 = vector.broadcast %cst_9 : f32 to vector<8x128xf32>
    %15 = arith.mulf %14, %11 : vector<8x128xf32>
    %16 = arith.select %13, %11, %15 : vector<8x128xi1>, vector<8x128xf32>
    %c0_10 = arith.constant 0 : index
    %c1 = arith.constant 1 : index
    %c0_11 = arith.constant 0 : index
    %c0_12 = arith.constant 0 : index
    %17 = vector.load %arg3[%c0_10, %c1, %c0_11, %c0_12] : memref<1x2x8x128xf32, #tpu.memory_space<vmem>>, vector<1x1x8x128xf32>
    %18 = vector.shape_cast %17 : vector<1x1x8x128xf32> to vector<8x128xf32>
    %19 = vector.shape_cast %16 : vector<8x128xf32> to vector<1x1x8x128xf32>
    tpu.vector_store %arg3[%c0_10, %c1, %c0_11, %c0_12], %19 {strides = array<i32>} : memref<1x2x8x128xf32, #tpu.memory_space<vmem>>, vector<1x1x8x128xf32>,
    return
  }
  func.func @transform_0(%arg0: i32, %arg1: i32) -> (i32, i32, i32) {
    %c0_i32 = arith.constant 0 : i32
    %c0_i32_0 = arith.constant 0 : i32
    return %arg0, %arg1, %c0_i32 : i32, i32, i32
  }
  func.func @transform_1(%arg0: i32, %arg1: i32) -> (i32, i32, i32, i32) {
    %c0_i32 = arith.constant 0 : i32
    %c0_i32_0 = arith.constant 0 : i32
    %c0_i32_1 = arith.constant 0 : i32
    return %arg0, %c0_i32, %arg1, %c0_i32_0 : i32, i32, i32, i32
  }
}

</mosaic_0001>

<llo_original>
// kernel: tpu_custom_call.1
$region0: #{tpu_custom_call.1}
  #allocation0 [shape = 'u32[]', space=smem, size = 0x4, offset = 0x4, fixed_abs, tag = 'smem constant byte address 0x4 - core index']
  #allocation1 [shape = 'u32[144,128]{1,0:T(1,128)}', space=vmem, size = 0x12000, scoped, tag = 'internal scratch']
  %s0 = inlined_call_operand.hbm [shape: f32[2,8,128], index: 0, kind: input, shape index: {}]
  %s1 = inlined_call_operand.hbm [shape: f32[2,2,8,128], index: 1, kind: output, shape index: {}]
  %s2 = sld [smem:[#allocation0]]
  $region41: #{tpu_custom_call.1} parent=0
    _
  %s4 = ssub.s32 1, %s2
  %s5 = scalar_select 0, %s4, %s2
  $region1: #{tpu_custom_call.1} parent=0
    #allocation2 [shape = 'u8[8192]{0}', space=vmem, size = 0x2000, scoped, tag = 'input window, operand 0']
    #allocation3 [shape = 's32[2]{0}', space=sflag, size = 0x8, scoped, tag = 'scoped memory for tpu_custom_call.1']
    #allocation4 [shape = 's32[2]{0}', space=sflag, size = 0x8, scoped, tag = 'scoped memory for tpu_custom_call.1']
    #allocation5 [shape = 'u8[16384]{0}', space=vmem, size = 0x4000, scoped, tag = 'output window, operand 0']
    %6 = vsyncpa [#allocation3], 0
    %s7 = scalar_lea.sflag [#allocation3], 1
    %8 = vsyncpa %s7, 0
    %9 = vsyncpa [#allocation4], 0
    %s10 = scalar_lea.sflag [#allocation4], 1
    %11 = vsyncpa %s10, 0
    loop: start=0, step=1, limit=4
    $region2: #{tpu_custom_call.1} parent=1 // loop_pre_header
      _
    $region3: #{tpu_custom_call.1} parent=1 // loop_header
      %s13 = sphi 0, %s17
      %p14 = scmp.ge.s32.totalorder %s13, 4
      %s20 = sphi 0, %s32
      %s21 = sphi 0, %s28
      %s22 = sphi 0, %s20
      %s23 = sphi 0, %s21
      %s24 = sphi 0, %s22
      %s25 = sphi 0, %s23
      %s37 = sphi 0, %s39
      %s40 = sphi 0, %s37
      %s41 = sphi 0, %s40
      %s57 = sphi 0, %s41
      %s65 = sphi 0, %s67
      %s68 = sphi 0, %s65
      %s69 = sphi 0, %s68
      %s85 = sphi 0, %s69
    $region4: #{tpu_custom_call.1} parent=1 // loop_header_branch
      %16 = sbr.rel (%p14) target = $region8
    $region5: #{tpu_custom_call.1} parent=1 // loop_body
      %s18 = ssub.s32 %s13, 1
      %s19 = ssub.s32 %s13, 2
      %s26 = sadd.s32 1, %s21
      %p27 = scmp.ge.s32.totalorder %s26, 1
      %s28 = scalar_select %p27, 0, %s26
      %s29 = sadd.s32 1, %s20
      %s30 = scalar_select %p27, %s29, %s20
      %p31 = scmp.ge.s32.totalorder %s30, 2
      %s32 = scalar_select %p31, 0, %s30
      %s33 = ssub.s32 %s20, %s32
      %s34 = ssub.s32 %s21, %s28
      %s35 = sor.u32 %s33, %s34
      %p36 = scmp.eq.s32.totalorder %s35, 0
      %s38 = sadd.s32 %s37, 1
      %s39 = scalar_select %p36, %s37, %s38
      %p42 = pneg %p36
      %p43 = scmp.eq.s32.totalorder %s13, 1
      %p44 = por %p42, %p43
      %p45 = scmp.ne.s32.totalorder %s37, %s40
      %p46 = scmp.eq.s32.totalorder %s13, 0
      %p47 = por %p45, %p46
      %p48 = scmp.ne.s32.totalorder %s37, %s40
      %p49 = scmp.eq.s32.totalorder %s18, 1
      %p50 = por %p48, %p49
      %p51 = scmp.ne.s32.totalorder %s40, %s41
      %p52 = scmp.eq.s32.totalorder %s18, 0
      %p53 = por %p51, %p52
      %p54 = scmp.ne.s32.totalorder %s40, %s41
      %p55 = scmp.eq.s32.totalorder %s19, 1
      %p56 = por %p54, %p55
      %p58 = scmp.ne.s32.totalorder %s41, %s57
      %p59 = scmp.eq.s32.totalorder %s19, 0
      %p60 = por %p58, %p59
      %s61 = ssub.s32 %s20, %s32
      %s62 = ssub.s32 %s21, %s28
      %s63 = sor.u32 %s61, %s62
      %p64 = scmp.eq.s32.totalorder %s63, 0
      %s66 = sadd.s32 %s65, 1
      %s67 = scalar_select %p64, %s65, %s66
      %p70 = pneg %p64
      %p71 = scmp.eq.s32.totalorder %s13, 1
      %p72 = por %p70, %p71
      %p73 = scmp.ne.s32.totalorder %s65, %s68
      %p74 = scmp.eq.s32.totalorder %s13, 0
      %p75 = por %p73, %p74
      %p76 = scmp.ne.s32.totalorder %s65, %s68
      %p77 = scmp.eq.s32.totalorder %s18, 1
      %p78 = por %p76, %p77
      %p79 = scmp.ne.s32.totalorder %s68, %s69
      %p80 = scmp.eq.s32.totalorder %s18, 0
      %p81 = por %p79, %p80
      %p82 = scmp.ne.s32.totalorder %s68, %s69
      %p83 = scmp.eq.s32.totalorder %s19, 1
      %p84 = por %p82, %p83
      %p86 = scmp.ne.s32.totalorder %s69, %s85
      %p87 = scmp.eq.s32.totalorder %s19, 0
      %p88 = por %p86, %p87
      %p89 = scmp.le.s32.totalorder 1, %s13
      %p90 = scmp.lt.s32.totalorder %s13, 3
      %p91 = pnand %p89, %p90
      %p92 = pneg %p91
      // Predicated region
      $region9: #{tpu_custom_call.1} parent=5 // pred_check
        _
      $region10: #{tpu_custom_call.1} parent=5 // pred_check_branch
        %94 = sbr.rel (%p91) target = $region12
      $region11: #{tpu_custom_call.1} parent=5 // pred_region
        %s95 = ssub.s32 %s13, 1
      $region12: #{tpu_custom_call.1} parent=5 // pred_fallthru
        _
      %p96 = scmp.lt.s32.totalorder %s13, 2
      // Predicated region
      $region13: #{tpu_custom_call.1} parent=5 // pred_check
        %p97 = pneg %p96
      $region14: #{tpu_custom_call.1} parent=5 // pred_check_branch
        %99 = sbr.rel (%p97) target = $region16
      $region15: #{tpu_custom_call.1} parent=5 // pred_region
        // Predicated region
        $region17: #{tpu_custom_call.1} parent=15 // pred_check
          %p100 = pneg %p47
        $region18: #{tpu_custom_call.1} parent=15 // pred_check_branch
          %102 = sbr.rel (%p100) target = $region20
        $region19: #{tpu_custom_call.1} parent=15 // pred_region
          %s103 = sand.u32 %s37, 1
          %s104 = scalar_lea.sflag [#allocation3], %s103
          %s105 = sand.u32 %s37, 1
          %s106 = smul.addr %s105, 8
          %s107 = scalar_lea.vmem [#allocation2], %s106
          %s109 = ssub.s32 128, 128
          %110 = vsyncadd %s104, %s109
          %s111 = sadd.s32 %s21, %s20
          %s112 = smul.addr %s111, 128
          %s113 = scalar_lea.hbm %s0, %s112
          %s115 = sshll.u32 %s107, 4
          %s116 = int_to_ptr.vmem [resolvable:$true] %s115
          %118 = dma.hbm_to_vmem [thread:$0]  %s113, 128, %s116, %s104
        $region20: #{tpu_custom_call.1} parent=15 // pred_fallthru
          _
      $region16: #{tpu_custom_call.1} parent=5 // pred_fallthru
        _
      %p119 = scmp.le.s32.totalorder 1, %s13
      %p120 = scmp.lt.s32.totalorder %s13, 3
      %p121 = pnand %p119, %p120
      %p122 = pneg %p121
      // Predicated region
      $region21: #{tpu_custom_call.1} parent=5 // pred_check
        _
      $region22: #{tpu_custom_call.1} parent=5 // pred_check_branch
        %124 = sbr.rel (%p121) target = $region24
      $region23: #{tpu_custom_call.1} parent=5 // pred_region
        %s125 = ssub.s32 %s13, 1
        %s126 = sand.u32 %s40, 1
        %s127 = scalar_lea.sflag [#allocation3], %s126
        %s128 = sand.u32 %s40, 1
        %s129 = smul.addr %s128, 8
        %s130 = scalar_lea.vmem [#allocation2], %s129
        // Predicated region
        $region25: #{tpu_custom_call.1} parent=23 // pred_check
          %p131 = pneg %p53
        $region26: #{tpu_custom_call.1} parent=23 // pred_check_branch
          %133 = sbr.rel (%p131) target = $region28
        $region27: #{tpu_custom_call.1} parent=23 // pred_region
          %134 = dma.done %s127, 128
        $region28: #{tpu_custom_call.1} parent=23 // pred_fallthru
          _
        %s135 = sand.u32 %s40, 1
        %s136 = scalar_lea.sflag [#allocation3], %s135
        %s137 = sand.u32 %s40, 1
        %s138 = smul.addr %s137, 8
        %s139 = scalar_lea.vmem [#allocation2], %s138
        %p140 = pneg %p53
        %p141 = pneg %p50
        %p142 = pneg %p81
        %p143 = pneg %p78
        %s144 = sand.u32 %s68, 1
        %s145 = scalar_lea.sflag [#allocation4], %s144
        %s146 = sand.u32 %s68, 1
        %s147 = smul.addr %s146, 16
        %s148 = scalar_lea.vmem [#allocation5], %s147
        %v149 = vld [vmem:[%s130] sm:$0xff]
        %vm150 = vcmp.ge.f32.partialorder %v149, 0.0
        %v151 = vmul.f32 %v149, 0.01
        %v152 = vsel %vm150, %v149, %v151
        %153 = vst [vmem:[%s148] sm:$0xff] %v152
        %v154 = vsub.f32 0.0, %v149
        %vm155 = vcmp.ge.f32.partialorder %v154, 0.0
        %v156 = vmul.f32 %v154, 0.01
        %v157 = vsel %vm155, %v154, %v156
        %s158 = scalar_lea.vmem %s148, 8 [#allocation5]
        %159 = vst [vmem:[%s158] sm:$0xff] %v157
        %s160 = sand.u32 %s68, 1
        %s161 = scalar_lea.sflag [#allocation4], %s160
        %s162 = sand.u32 %s68, 1
        %s163 = smul.addr %s162, 16
        %s164 = scalar_lea.vmem [#allocation5], %s163
        // Predicated region
        $region29: #{tpu_custom_call.1} parent=23 // pred_check
          %p165 = pneg %p78
        $region30: #{tpu_custom_call.1} parent=23 // pred_check_branch
          %167 = sbr.rel (%p165) target = $region32
        $region31: #{tpu_custom_call.1} parent=23 // pred_region
          %s169 = ssub.s32 256, 256
          %170 = vsyncadd %s161, %s169
          %s171 = smul.addr %s22, 2
          %s172 = sadd.s32 %s23, %s171
          %s173 = smul.addr %s172, 128
          %s174 = scalar_lea.hbm %s1, %s173
          %s175 = sshll.u32 %s164, 4
          %s176 = int_to_ptr.vmem [resolvable:$true] %s175
          %181 = dma.vmem_to_hbm [thread:$0]  %s176, 256, %s174, %s161, 128, 128, 8
        $region32: #{tpu_custom_call.1} parent=23 // pred_fallthru
          _
      $region24: #{tpu_custom_call.1} parent=5 // pred_fallthru
        _
      %p182 = scmp.le.s32.totalorder 2, %s13
      // Predicated region
      $region33: #{tpu_custom_call.1} parent=5 // pred_check
        %p183 = pneg %p182
      $region34: #{tpu_custom_call.1} parent=5 // pred_check_branch
        %185 = sbr.rel (%p183) target = $region36
      $region35: #{tpu_custom_call.1} parent=5 // pred_region
        %s186 = ssub.s32 %s13, 2
        // Predicated region
        $region37: #{tpu_custom_call.1} parent=35 // pred_check
          %p187 = pneg %p84
        $region38: #{tpu_custom_call.1} parent=35 // pred_check_branch
          %189 = sbr.rel (%p187) target = $region40
        $region39: #{tpu_custom_call.1} parent=35 // pred_region
          %s190 = sand.u32 %s69, 1
          %s191 = scalar_lea.sflag [#allocation4], %s190
          %s192 = sand.u32 %s69, 1
          %s193 = smul.addr %s192, 16
          %s194 = scalar_lea.vmem [#allocation5], %s193
          %195 = dma.done %s191, 256
        $region40: #{tpu_custom_call.1} parent=35 // pred_fallthru
          _
      $region36: #{tpu_custom_call.1} parent=5 // pred_fallthru
        _
    $region6: #{tpu_custom_call.1} parent=1 // loop_footer
      %s17 = sadd.s32 1, %s13
    $region7: #{tpu_custom_call.1} parent=1 // loop_footer_branch
      %12 = sbr.rel target = $region3
    $region8: #{tpu_custom_call.1} parent=1 // loop_exit
      _
    %196 = vsyncpa [#allocation3], 1
    %s197 = scalar_lea.sflag [#allocation3], 1
    %198 = vsyncpa %s197, 1
    %199 = vsyncpa [#allocation4], 1
    %s200 = scalar_lea.sflag [#allocation4], 1
    %201 = vsyncpa %s200, 1

</llo_original>
